<compile_context>
chip_gen: v7x
topology: tpu7x:2x2x1
jax: 0.10.0
libtpu: 0.0.40
codegen_flags: <defaults>
</compile_context>

<pallas_src>
import jax
import jax.numpy as jnp
from jax.experimental import pallas as pl
from jax.experimental.pallas import tpu as pltpu

H1 = 256          # layer1 out features
H2 = 128          # layer2 out features
OUT_PAD = 128     # lane-padded output width (n_actions <= OUT_PAD)
MAX_TM = 1024     # max batch-tile rows per grid step


def _round_up(x, m):
    return ((x + m - 1) // m) * m


def dqn_kernel(x_ref, w1_ref, b1_ref, w2_ref, b2_ref, w3_ref, b3_ref, o_ref):
    # x / weights arrive already in bf16 (cast in the wrapper); f32 accumulation.
    # layer1 + relu
    h1 = jnp.dot(x_ref[...], w1_ref[...], preferred_element_type=jnp.float32)
    h1 = jnp.maximum(h1 + b1_ref[...], 0.0)
    # layer2 + relu (h1 -> bf16 cast is unavoidable: ReLU data dependency)
    h2 = jnp.dot(h1.astype(jnp.bfloat16), w2_ref[...],
                 preferred_element_type=jnp.float32)
    h2 = jnp.maximum(h2 + b2_ref[...], 0.0)
    # layer3 (no activation), lane-padded to OUT_PAD, stored as bf16
    out = jnp.dot(h2.astype(jnp.bfloat16), w3_ref[...],
                  preferred_element_type=jnp.float32)
    o_ref[...] = (out + b3_ref[...]).astype(o_ref.dtype)


def dqn_forward(x, params):
    """x: [B, n_obs] float32. params: dict of w1,b1,w2,b2,w3,b3 (weights [in,out])."""
    w1, b1, w2, b2, w3, b3 = (params[k] for k in ("w1", "b1", "w2", "b2", "w3", "b3"))
    B, n_obs = x.shape
    n_actions = w3.shape[1]
    assert n_actions <= OUT_PAD, f"n_actions={n_actions} exceeds OUT_PAD={OUT_PAD}"

    # Wrapper-side bf16 pre-cast of matmul operands (weights stay VMEM-resident
    # across grid steps, so casting here removes per-step pack work in-kernel).
    xb = x.astype(jnp.bfloat16)
    w1b = w1.astype(jnp.bfloat16)
    w2b = w2.astype(jnp.bfloat16)
    # layer3 weight / bias zero-padded to a lane-dense (multiple-of-128) width.
    w3p = jnp.zeros((H2, OUT_PAD), jnp.bfloat16).at[:, :n_actions].set(
        w3.astype(jnp.bfloat16))
    b3p = jnp.zeros((1, OUT_PAD), jnp.float32).at[:, :n_actions].set(b3)

    # Balanced batch tiling: never pad by more than 15 rows, and guarantee >=2
    # (even) grid steps when B >= 16 so both v7x TensorCores get work.
    grid_n = pl.cdiv(B, MAX_TM)
    if B >= 16:
        grid_n = _round_up(max(grid_n, 2), 2)
    tm = _round_up(pl.cdiv(B, grid_n), 16)   # 16-row multiple: bf16 sublane packing
    B_pad = grid_n * tm
    if B_pad != B:
        xb = jnp.pad(xb, ((0, B_pad - B), (0, 0)))
    grid = (grid_n,)

    resident = lambda i: (0, 0)  # weights/biases: same block every grid step
    out_pad = pl.pallas_call(
        dqn_kernel,
        out_shape=jax.ShapeDtypeStruct((B_pad, OUT_PAD), jnp.bfloat16),
        grid=grid,
        in_specs=[
            pl.BlockSpec((tm, n_obs), lambda i: (i, 0)),   # x tile (bf16)
            pl.BlockSpec((n_obs, H1), resident),           # w1 (bf16)
            pl.BlockSpec((1, H1), resident),               # b1 (f32)
            pl.BlockSpec((H1, H2), resident),              # w2 (bf16)
            pl.BlockSpec((1, H2), resident),               # b2 (f32)
            pl.BlockSpec((H2, OUT_PAD), resident),         # w3 (bf16, padded)
            pl.BlockSpec((1, OUT_PAD), resident),          # b3 (f32, padded)
        ],
        out_specs=pl.BlockSpec((tm, OUT_PAD), lambda i: (i, 0)),
        compiler_params=pltpu.CompilerParams(
            dimension_semantics=("parallel",),             # 2 TCs on v7x
        ),
    )(xb, w1b, b1, w2b, b2, w3p, b3p)

    # Slice off batch / lane padding and restore the module's f32 output dtype.
    return out_pad[:B, :n_actions].astype(jnp.float32)


def init_params(key, n_obs, n_actions):
    """Deterministic init mirroring torch.nn.Linear shapes.
    Weights stored transposed ([in, out]) relative to torch Linear.weight ([out, in])."""
    def linear(k, fan_in, fan_out):
        kw, kb = jax.random.split(k)
        bound = 1.0 / jnp.sqrt(fan_in)
        w = jax.random.uniform(kw, (fan_in, fan_out), jnp.float32, -bound, bound)
        b = jax.random.uniform(kb, (1, fan_out), jnp.float32, -bound, bound)
        return w, b

    k1, k2, k3 = jax.random.split(key, 3)
    w1, b1 = linear(k1, n_obs, H1)
    w2, b2 = linear(k2, H1, H2)
    w3, b3 = linear(k3, H2, n_actions)
    return {"w1": w1, "b1": b1, "w2": w2, "b2": b2, "w3": w3, "b3": b3}


def dqn_reference_f32(x, p):
    h1 = jnp.maximum(x @ p["w1"] + p["b1"], 0.0)
    h2 = jnp.maximum(h1 @ p["w2"] + p["b2"], 0.0)
    return h2 @ p["w3"] + p["b3"]


if __name__ == "__main__":
    key = jax.random.PRNGKey(0)
    kx, kp, kx2 = jax.random.split(key, 3)

    batch = 8
    n_obs = 32       # number_of_observations
    n_actions = 4    # number_of_actions

    x = jax.random.normal(kx, (batch, n_obs), jnp.float32)
    params = init_params(kp, n_obs, n_actions)

    out = jax.block_until_ready(dqn_forward(x, params))
    ref = dqn_reference_f32(x, params)
    assert out.shape == (batch, n_actions)
    # bf16 matmul operands + bf16 store (f32 accumulate) vs f32 reference.
    assert jnp.allclose(out, ref, atol=4e-2, rtol=4e-2), "mismatch vs reference (small batch)"

    # Exercise the multi-block grid (>=2 steps) + balanced batch-padding path.
    x2 = jax.random.normal(kx2, (300, n_obs), jnp.float32)
    out2 = jax.block_until_ready(dqn_forward(x2, params))
    ref2 = dqn_reference_f32(x2, params)
    assert out2.shape == (300, n_actions)
    assert jnp.allclose(out2, ref2, atol=4e-2, rtol=4e-2), "mismatch vs reference (batched)"

    print("KERNEL_OK")
</pallas_src>

<mosaic_0001>
module attributes {stable_mosaic.version = 11 : i64} {
  func.func @dqn_kernel(%arg0: i32, %arg1: memref<16x32xbf16, #tpu.memory_space<vmem>>, %arg2: memref<32x256xbf16, #tpu.memory_space<vmem>>, %arg3: memref<1x256xf32, #tpu.memory_space<vmem>>, %arg4: memref<256x128xbf16, #tpu.memory_space<vmem>>, %arg5: memref<1x128xf32, #tpu.memory_space<vmem>>, %arg6: memref<128x128xbf16, #tpu.memory_space<vmem>>, %arg7: memref<1x128xf32, #tpu.memory_space<vmem>>, %arg8: memref<16x128xbf16, #tpu.memory_space<vmem>>) attributes {dimension_semantics = [#tpu.dimension_semantics<parallel>], iteration_bounds = array<i64: 1>, scalar_prefetch = 0 : i64, scratch_operands = 0 : i64, tpu.core_type = #tpu.core_type<tc>, window_params = [{transform_indices = @transform_0, window_bounds = array<i64: 16, 32>}, {pipeline_mode = #tpu.pipeline_mode<synchronous>, transform_indices = @transform_1, window_bounds = array<i64: 32, 256>}, {pipeline_mode = #tpu.pipeline_mode<synchronous>, transform_indices = @transform_2, window_bounds = array<i64: 1, 256>}, {pipeline_mode = #tpu.pipeline_mode<synchronous>, transform_indices = @transform_3, window_bounds = array<i64: 256, 128>}, {pipeline_mode = #tpu.pipeline_mode<synchronous>, transform_indices = @transform_4, window_bounds = array<i64: 1, 128>}, {pipeline_mode = #tpu.pipeline_mode<synchronous>, transform_indices = @transform_5, window_bounds = array<i64: 128, 128>}, {pipeline_mode = #tpu.pipeline_mode<synchronous>, transform_indices = @transform_6, window_bounds = array<i64: 1, 128>}, {transform_indices = @transform_7, window_bounds = array<i64: 16, 128>}]} {
    %c0 = arith.constant 0 : index
    %c0_0 = arith.constant 0 : index
    %0 = vector.load %arg1[%c0, %c0_0] : memref<16x32xbf16, #tpu.memory_space<vmem>>, vector<16x32xbf16>
    %c0_1 = arith.constant 0 : index
    %c0_2 = arith.constant 0 : index
    %1 = vector.load %arg2[%c0_1, %c0_2] : memref<32x256xbf16, #tpu.memory_space<vmem>>, vector<32x256xbf16>
    %cst = arith.constant dense<0.000000e+00> : vector<16x256xf32>
    %2 = tpu.matmul %0, %1, %cst {dimension_numbers = #tpu.dot_dimension_numbers<[1], [0], [0], [1], [0, 0, 1, 1], [], []>} : vector<16x32xbf16>, vector<32x256xbf16>, vector<16x256xf32> -> vector<16x256xf32>
    %c0_3 = arith.constant 0 : index
    %c0_4 = arith.constant 0 : index
    %3 = vector.load %arg3[%c0_3, %c0_4] : memref<1x256xf32, #tpu.memory_space<vmem>>, vector<1x256xf32>
    %4 = vector.broadcast %3 : vector<1x256xf32> to vector<16x256xf32>
    %5 = arith.addf %2, %4 : vector<16x256xf32>
    %cst_5 = arith.constant 0.000000e+00 : f32
    %6 = vector.broadcast %cst_5 : f32 to vector<16x256xf32>
    %7 = arith.maximumf %5, %6 : vector<16x256xf32>
    %8 = arith.truncf %7 : vector<16x256xf32> to vector<16x256xbf16>
    %c0_6 = arith.constant 0 : index
    %c0_7 = arith.constant 0 : index
    %9 = vector.load %arg4[%c0_6, %c0_7] : memref<256x128xbf16, #tpu.memory_space<vmem>>, vector<256x128xbf16>
    %cst_8 = arith.constant dense<0.000000e+00> : vector<16x128xf32>
    %10 = tpu.matmul %8, %9, %cst_8 {dimension_numbers = #tpu.dot_dimension_numbers<[1], [0], [0], [1], [0, 0, 1, 1], [], []>} : vector<16x256xbf16>, vector<256x128xbf16>, vector<16x128xf32> -> vector<16x128xf32>
    %c0_9 = arith.constant 0 : index
    %c0_10 = arith.constant 0 : index
    %11 = vector.load %arg5[%c0_9, %c0_10] : memref<1x128xf32, #tpu.memory_space<vmem>>, vector<1x128xf32>
    %12 = vector.broadcast %11 : vector<1x128xf32> to vector<16x128xf32>
    %13 = arith.addf %10, %12 : vector<16x128xf32>
    %cst_11 = arith.constant 0.000000e+00 : f32
    %14 = vector.broadcast %cst_11 : f32 to vector<16x128xf32>
    %15 = arith.maximumf %13, %14 : vector<16x128xf32>
    %16 = arith.truncf %15 : vector<16x128xf32> to vector<16x128xbf16>
    %c0_12 = arith.constant 0 : index
    %c0_13 = arith.constant 0 : index
    %17 = vector.load %arg6[%c0_12, %c0_13] : memref<128x128xbf16, #tpu.memory_space<vmem>>, vector<128x128xbf16>
    %cst_14 = arith.constant dense<0.000000e+00> : vector<16x128xf32>
    %18 = tpu.matmul %16, %17, %cst_14 {dimension_numbers = #tpu.dot_dimension_numbers<[1], [0], [0], [1], [0, 0, 1, 1], [], []>} : vector<16x128xbf16>, vector<128x128xbf16>, vector<16x128xf32> -> vector<16x128xf32>
    %c0_15 = arith.constant 0 : index
    %c0_16 = arith.constant 0 : index
    %19 = vector.load %arg7[%c0_15, %c0_16] : memref<1x128xf32, #tpu.memory_space<vmem>>, vector<1x128xf32>
    %20 = vector.broadcast %19 : vector<1x128xf32> to vector<16x128xf32>
    %21 = arith.addf %18, %20 : vector<16x128xf32>
    %22 = arith.truncf %21 : vector<16x128xf32> to vector<16x128xbf16>
    %c0_17 = arith.constant 0 : index
    %c0_18 = arith.constant 0 : index
    %23 = vector.load %arg8[%c0_17, %c0_18] : memref<16x128xbf16, #tpu.memory_space<vmem>>, vector<16x128xbf16>
    tpu.vector_store %arg8[%c0_17, %c0_18], %22 {strides = array<i32>} : memref<16x128xbf16, #tpu.memory_space<vmem>>, vector<16x128xbf16>,
    return
  }
  func.func @transform_0(%arg0: i32) -> (i32, i32) {
    %c0_i32 = arith.constant 0 : i32
    %c0_i32_0 = arith.constant 0 : i32
    return %arg0, %c0_i32 : i32, i32
  }
  func.func @transform_1(%arg0: i32) -> (i32, i32) {
    %c0_i32 = arith.constant 0 : i32
    %c0_i32_0 = arith.constant 0 : i32
    %c0_i32_1 = arith.constant 0 : i32
    return %c0_i32, %c0_i32_0 : i32, i32
  }
  func.func @transform_2(%arg0: i32) -> (i32, i32) {
    %c0_i32 = arith.constant 0 : i32
    %c0_i32_0 = arith.constant 0 : i32
    %c0_i32_1 = arith.constant 0 : i32
    return %c0_i32, %c0_i32_0 : i32, i32
  }
  func.func @transform_3(%arg0: i32) -> (i32, i32) {
    %c0_i32 = arith.constant 0 : i32
    %c0_i32_0 = arith.constant 0 : i32
    %c0_i32_1 = arith.constant 0 : i32
    return %c0_i32, %c0_i32_0 : i32, i32
  }
  func.func @transform_4(%arg0: i32) -> (i32, i32) {
    %c0_i32 = arith.constant 0 : i32
    %c0_i32_0 = arith.constant 0 : i32
    %c0_i32_1 = arith.constant 0 : i32
    return %c0_i32, %c0_i32_0 : i32, i32
  }
  func.func @transform_5(%arg0: i32) -> (i32, i32) {
    %c0_i32 = arith.constant 0 : i32
    %c0_i32_0 = arith.constant 0 : i32
    %c0_i32_1 = arith.constant 0 : i32
    return %c0_i32, %c0_i32_0 : i32, i32
  }
  func.func @transform_6(%arg0: i32) -> (i32, i32) {
    %c0_i32 = arith.constant 0 : i32
    %c0_i32_0 = arith.constant 0 : i32
    %c0_i32_1 = arith.constant 0 : i32
    return %c0_i32, %c0_i32_0 : i32, i32
  }
  func.func @transform_7(%arg0: i32) -> (i32, i32) {
    %c0_i32 = arith.constant 0 : i32
    %c0_i32_0 = arith.constant 0 : i32
    return %arg0, %c0_i32 : i32, i32
  }
}

</mosaic_0001>

<llo_original>
// kernel: tpu_custom_call.1
$region0: #{tpu_custom_call.1}
  #allocation0 [shape = 'u32[]', space=smem, size = 0x4, offset = 0x4, fixed_abs, tag = 'smem constant byte address 0x4 - core index']
  #allocation1 [shape = 'u32[144,128]{1,0:T(1,128)}', space=vmem, size = 0x12000, scoped, tag = 'internal scratch']
  %s0 = inlined_call_operand.hbm [shape: bf16[16,32], index: 0, kind: input, shape index: {}]
  %s1 = inlined_call_operand.hbm [shape: bf16[32,256], index: 1, kind: input, shape index: {}]
  %s2 = inlined_call_operand.vmem [shape: f32[1,256], index: 2, kind: input, shape index: {}]
  %s3 = inlined_call_operand.hbm [shape: bf16[256,128], index: 3, kind: input, shape index: {}]
  %s4 = inlined_call_operand.vmem [shape: f32[1,128], index: 4, kind: input, shape index: {}]
  %s5 = inlined_call_operand.hbm [shape: bf16[128,128], index: 5, kind: input, shape index: {}]
  %s6 = inlined_call_operand.vmem [shape: f32[1,128], index: 6, kind: input, shape index: {}]
  %s7 = inlined_call_operand.hbm [shape: bf16[16,128], index: 7, kind: output, shape index: {}]
  %s8 = sld [smem:[#allocation0]]
  $region54: #{tpu_custom_call.1} parent=0
    _
  %s10 = ssub.s32 1, %s8
  %s11 = scalar_select 0, %s10, %s8
  $region1: #{tpu_custom_call.1} parent=0
    #allocation2 [shape = 'u8[4096]{0}', space=vmem, size = 0x1000, scoped, tag = 'input window, operand 0, single buffered']
    #allocation3 [shape = 's32[1]{0}', space=sflag, size = 0x4, scoped, tag = 'scoped memory for tpu_custom_call.1']
    #allocation4 [shape = 's32[1]{0}', space=sflag, size = 0x4, scoped, tag = 'scoped memory for tpu_custom_call.1']
    #allocation5 [shape = 'u8[16384]{0}', space=vmem, size = 0x4000, scoped, tag = 'input window, operand 1, single buffered']
    #allocation6 [shape = 's32[1]{0}', space=sflag, size = 0x4, scoped, tag = 'scoped memory for tpu_custom_call.1']
    #allocation7 [shape = 'u8[65536]{0}', space=vmem, size = 0x10000, scoped, tag = 'input window, operand 3, single buffered']
    #allocation8 [shape = 'u8[32768]{0}', space=vmem, size = 0x8000, scoped, tag = 'input window, operand 5, single buffered']
    #allocation9 [shape = 's32[1]{0}', space=sflag, size = 0x4, scoped, tag = 'scoped memory for tpu_custom_call.1']
    #allocation10 [shape = 'u8[4096]{0}', space=vmem, size = 0x1000, scoped, tag = 'output window, operand 0, single buffered']
    %12 = vsyncpa [#allocation3], 0
    %13 = vsyncpa [#allocation6], 0
    %14 = vsyncpa [#allocation9], 0
    %15 = vsyncpa [#allocation4], 0
    // Predicated region
    $region2: #{tpu_custom_call.1} parent=1 // pred_check
      _
    $region3: #{tpu_custom_call.1} parent=1 // pred_check_branch
      %17 = sbr.rel (0) target = $region5
    $region4: #{tpu_custom_call.1} parent=1 // pred_region
      %s19 = ssub.s32 128, 128
      %20 = vsyncadd [#allocation3], %s19
      %s21 = sshll.u32 [#allocation2], 4
      %s22 = int_to_ptr.vmem [resolvable:$true] %s21
      %27 = dma.hbm_to_vmem [thread:$0]  %s0, 128, %s22, [#allocation3], 64, 64, 4
    $region5: #{tpu_custom_call.1} parent=1 // pred_fallthru
      _
    // Predicated region
    $region6: #{tpu_custom_call.1} parent=1 // pred_check
      _
    $region7: #{tpu_custom_call.1} parent=1 // pred_check_branch
      %29 = sbr.rel (0) target = $region9
    $region8: #{tpu_custom_call.1} parent=1 // pred_region
      %s31 = ssub.s32 512, 512
      %32 = vsyncadd [#allocation6], %s31
      %s33 = sshll.u32 [#allocation5], 4
      %s34 = int_to_ptr.vmem [resolvable:$true] %s33
      %39 = dma.hbm_to_vmem [thread:$0]  %s1, 512, %s34, [#allocation6], 128, 128, 8
    $region9: #{tpu_custom_call.1} parent=1 // pred_fallthru
      _
    // Predicated region
    $region10: #{tpu_custom_call.1} parent=1 // pred_check
      _
    $region11: #{tpu_custom_call.1} parent=1 // pred_check_branch
      %41 = sbr.rel (0) target = $region13
    $region12: #{tpu_custom_call.1} parent=1 // pred_region
      _
    $region13: #{tpu_custom_call.1} parent=1 // pred_fallthru
      _
    // Predicated region
    $region14: #{tpu_custom_call.1} parent=1 // pred_check
      _
    $region15: #{tpu_custom_call.1} parent=1 // pred_check_branch
      %43 = sbr.rel (0) target = $region17
    $region16: #{tpu_custom_call.1} parent=1 // pred_region
      %s45 = ssub.s32 2048, 2048
      %46 = vsyncadd [#allocation6], %s45
      %s47 = sshll.u32 [#allocation7], 4
      %s48 = int_to_ptr.vmem [resolvable:$true] %s47
      %53 = dma.hbm_to_vmem [thread:$0]  %s3, 2048, %s48, [#allocation6], 64, 64, 4
    $region17: #{tpu_custom_call.1} parent=1 // pred_fallthru
      _
    // Predicated region
    $region18: #{tpu_custom_call.1} parent=1 // pred_check
      _
    $region19: #{tpu_custom_call.1} parent=1 // pred_check_branch
      %55 = sbr.rel (0) target = $region21
    $region20: #{tpu_custom_call.1} parent=1 // pred_region
      _
    $region21: #{tpu_custom_call.1} parent=1 // pred_fallthru
      _
    // Predicated region
    $region22: #{tpu_custom_call.1} parent=1 // pred_check
      _
    $region23: #{tpu_custom_call.1} parent=1 // pred_check_branch
      %57 = sbr.rel (0) target = $region25
    $region24: #{tpu_custom_call.1} parent=1 // pred_region
      %s59 = ssub.s32 1024, 1024
      %60 = vsyncadd [#allocation9], %s59
      %s61 = sshll.u32 [#allocation8], 4
      %s62 = int_to_ptr.vmem [resolvable:$true] %s61
      %67 = dma.hbm_to_vmem [thread:$0]  %s5, 1024, %s62, [#allocation9], 64, 64, 4
    $region25: #{tpu_custom_call.1} parent=1 // pred_fallthru
      _
    // Predicated region
    $region26: #{tpu_custom_call.1} parent=1 // pred_check
      _
    $region27: #{tpu_custom_call.1} parent=1 // pred_check_branch
      %69 = sbr.rel (0) target = $region29
    $region28: #{tpu_custom_call.1} parent=1 // pred_region
      _
    $region29: #{tpu_custom_call.1} parent=1 // pred_fallthru
      _
    // Predicated region
    $region30: #{tpu_custom_call.1} parent=1 // pred_check
      _
    $region31: #{tpu_custom_call.1} parent=1 // pred_check_branch
      %71 = sbr.rel (0) target = $region33
    $region32: #{tpu_custom_call.1} parent=1 // pred_region
      %72 = dma.done [#allocation3], 128
    $region33: #{tpu_custom_call.1} parent=1 // pred_fallthru
      _
    // Predicated region
    $region34: #{tpu_custom_call.1} parent=1 // pred_check
      _
    $region35: #{tpu_custom_call.1} parent=1 // pred_check_branch
      %74 = sbr.rel (0) target = $region37
    $region36: #{tpu_custom_call.1} parent=1 // pred_region
      %75 = dma.done [#allocation6], 512
    $region37: #{tpu_custom_call.1} parent=1 // pred_fallthru
      _
    // Predicated region
    $region38: #{tpu_custom_call.1} parent=1 // pred_check
      _
    $region39: #{tpu_custom_call.1} parent=1 // pred_check_branch
      %77 = sbr.rel (0) target = $region41
    $region40: #{tpu_custom_call.1} parent=1 // pred_region
      %78 = dma.done [#allocation6], 2048
    $region41: #{tpu_custom_call.1} parent=1 // pred_fallthru
      _
    // Predicated region
    $region42: #{tpu_custom_call.1} parent=1 // pred_check
      _
    $region43: #{tpu_custom_call.1} parent=1 // pred_check_branch
      %80 = sbr.rel (0) target = $region45
    $region44: #{tpu_custom_call.1} parent=1 // pred_region
      %81 = dma.done [#allocation9], 1024
    $region45: #{tpu_custom_call.1} parent=1 // pred_fallthru
      _
    %v83 = vld [vmem:[#allocation2] sm:$0xf]
    %v84 = vld [vmem:[#allocation2 + $0x4] sm:$0xf]
    %v85 = vld [vmem:[#allocation5] sm:$0xff]
    %v86 = vld [vmem:[#allocation5 + $0x8] sm:$0xff]
    %v87 = vld [vmem:[#allocation5 + $0x10] sm:$0xff]
    %v88 = vld [vmem:[#allocation5 + $0x18] sm:$0xff]
    %v89 = vld [vmem:[%s2] sm:$0x3]
    %v91 = vlaneseq
    %v92 = vshrl.u32 %v91, 7
    %v93 = vsub.s32 0, %v92
    %v94 = vrot.slane %v89, %v93
    %v95 = vlaneseq
    %v96 = vshrl.u32 %v95, 7
    %v97 = vsub.s32 1, %v96
    %v98 = vrot.slane %v89, %v97
    %v103 = vunpack.c.l.b16 %v83
    %v104 = vunpack.c.l.b16 %v84
    %v105 = vpack.c.b16 %v104, %v103
    %v110 = vunpack.c.l.b16 %v85
    %v111 = vunpack.c.h.b16 %v85
    %v112 = vunpack.c.l.b16 %v86
    %v113 = vunpack.c.h.b16 %v86
    %v114 = vunpack.c.l.b16 %v87
    %v115 = vunpack.c.h.b16 %v87
    %v116 = vunpack.c.l.b16 %v88
    %v117 = vunpack.c.h.b16 %v88
    %v118 = vpack.c.b16 %v112, %v110
    %v119 = vpack.c.b16 %v113, %v111
    %v120 = vpack.c.b16 %v116, %v114
    %v121 = vpack.c.b16 %v117, %v115
    %vm126 = vcmask 261120
    %v128 = vsel %vm126, %v105, 0
    %130 = vmatprep.subr.bf16.mxu0 %v119
    %131 = vmatpush1.bf16.msra.mxu0 %v118
    %132 = vmatprep.subr.bf16.mxu0 %v121
    %133 = vmatpush1.bf16.msra.mxu0 %v120
    %134 = vmatprep.subr.bf16.mxu0 0
    %135 = vmatpush1.bf16.msra.mxu0 0
    %136 = vmatprep.subr.bf16.mxu0 0
    %137 = vmatpush1.bf16.msra.mxu0 0
    %138 = vmatprep.subr.bf16.mxu0 0
    %139 = vmatpush1.bf16.msra.mxu0 0
    %140 = vmatprep.subr.bf16.mxu0 0
    %141 = vmatpush1.bf16.msra.mxu0 0
    %142 = vmatprep.subr.bf16.mxu0 0
    %143 = vmatpush1.bf16.msra.mxu0 0
    %144 = vmatprep.subr.bf16.mxu0 0
    %145 = vmatpush1.bf16.msra.mxu0 0
    %146 = vmatprep.subr.bf16.mxu0 0
    %147 = vmatpush1.bf16.msra.mxu0 0
    %148 = vmatprep.subr.bf16.mxu0 0
    %149 = vmatpush1.bf16.msra.mxu0 0
    %150 = vmatprep.subr.bf16.mxu0 0
    %151 = vmatpush1.bf16.msra.mxu0 0
    %152 = vmatprep.subr.bf16.mxu0 0
    %153 = vmatpush1.bf16.msra.mxu0 0
    %154 = vmatprep.subr.bf16.mxu0 0
    %155 = vmatpush1.bf16.msra.mxu0 0
    %156 = vmatprep.subr.bf16.mxu0 0
    %157 = vmatpush1.bf16.msra.mxu0 0
    %158 = vmatprep.subr.bf16.mxu0 0
    %159 = vmatpush1.bf16.msra.mxu0 0
    %160 = vmatprep.subr.bf16.mxu0 0
    %161 = vmatpush1.bf16.msra.mxu0 0
    %162 = vmatprep.mubr.bf16.mxu0 0
    %163 = vmatmul.mubr.bf16.gmra.mrb[0].mxu0 %v128
    %v164 = vpop.f32.mrb[0].mxu0
    %v165 = vadd.f32 %v94, %v164
    %v166 = vpop.f32.mrb[0].mxu0
    %v167 = vadd.f32 %v98, %v166
    %v168 = vpop.f32.mrb[0].mxu0
    %v169 = vadd.f32 %v94, %v168
    %v170 = vpop.f32.mrb[0].mxu0
    %v171 = vadd.f32 %v98, %v170
    %172 = vdwg.mxu0
    %v173 = vmax.f32 %v165, 0.0
    %v174 = vmax.f32 %v167, 0.0
    %v175 = vmax.f32 %v169, 0.0
    %v176 = vmax.f32 %v171, 0.0
    %v177 = vpack.c.bf16 %v175, %v173
    %v178 = vpack.c.bf16 %v176, %v174
    %v179 = vld [vmem:[#allocation7] sm:$0xf]
    %v180 = vld [vmem:[#allocation7 + $0x4] sm:$0xf]
    %v181 = vld [vmem:[#allocation7 + $0x8] sm:$0xf]
    %v182 = vld [vmem:[#allocation7 + $0xc] sm:$0xf]
    %v183 = vld [vmem:[#allocation7 + $0x10] sm:$0xf]
    %v184 = vld [vmem:[#allocation7 + $0x14] sm:$0xf]
    %v185 = vld [vmem:[#allocation7 + $0x18] sm:$0xf]
    %v186 = vld [vmem:[#allocation7 + $0x1c] sm:$0xf]
    %v187 = vld [vmem:[#allocation7 + $0x20] sm:$0xf]
    %v188 = vld [vmem:[#allocation7 + $0x24] sm:$0xf]
    %v189 = vld [vmem:[#allocation7 + $0x28] sm:$0xf]
    %v190 = vld [vmem:[#allocation7 + $0x2c] sm:$0xf]
    %v191 = vld [vmem:[#allocation7 + $0x30] sm:$0xf]
    %v192 = vld [vmem:[#allocation7 + $0x34] sm:$0xf]
    %v193 = vld [vmem:[#allocation7 + $0x38] sm:$0xf]
    %v194 = vld [vmem:[#allocation7 + $0x3c] sm:$0xf]
    %v195 = vld [vmem:[#allocation7 + $0x40] sm:$0xf]
    %v196 = vld [vmem:[#allocation7 + $0x44] sm:$0xf]
    %v197 = vld [vmem:[#allocation7 + $0x48] sm:$0xf]
    %v198 = vld [vmem:[#allocation7 + $0x4c] sm:$0xf]
    %v199 = vld [vmem:[#allocation7 + $0x50] sm:$0xf]
    %v200 = vld [vmem:[#allocation7 + $0x54] sm:$0xf]
    %v201 = vld [vmem:[#allocation7 + $0x58] sm:$0xf]
    %v202 = vld [vmem:[#allocation7 + $0x5c] sm:$0xf]
    %v203 = vld [vmem:[#allocation7 + $0x60] sm:$0xf]
    %v204 = vld [vmem:[#allocation7 + $0x64] sm:$0xf]
    %v205 = vld [vmem:[#allocation7 + $0x68] sm:$0xf]
    %v206 = vld [vmem:[#allocation7 + $0x6c] sm:$0xf]
    %v207 = vld [vmem:[#allocation7 + $0x70] sm:$0xf]
    %v208 = vld [vmem:[#allocation7 + $0x74] sm:$0xf]
    %v209 = vld [vmem:[#allocation7 + $0x78] sm:$0xf]
    %v210 = vld [vmem:[#allocation7 + $0x7c] sm:$0xf]
    %v211 = vld [vmem:[%s4] sm:$0x1]
    %v213 = vlaneseq
    %v214 = vshrl.u32 %v213, 7
    %v215 = vsub.s32 0, %v214
    %v216 = vrot.slane %v211, %v215
    %v250 = vunpack.c.l.b16 %v179
    %v251 = vunpack.c.l.b16 %v180
    %v252 = vunpack.c.l.b16 %v181
    %v253 = vunpack.c.l.b16 %v182
    %v254 = vunpack.c.l.b16 %v183
    %v255 = vunpack.c.l.b16 %v184
    %v256 = vunpack.c.l.b16 %v185
    %v257 = vunpack.c.l.b16 %v186
    %v258 = vunpack.c.l.b16 %v187
    %v259 = vunpack.c.l.b16 %v188
    %v260 = vunpack.c.l.b16 %v189
    %v261 = vunpack.c.l.b16 %v190
    %v262 = vunpack.c.l.b16 %v191
    %v263 = vunpack.c.l.b16 %v192
    %v264 = vunpack.c.l.b16 %v193
    %v265 = vunpack.c.l.b16 %v194
    %v266 = vunpack.c.l.b16 %v195
    %v267 = vunpack.c.l.b16 %v196
    %v268 = vunpack.c.l.b16 %v197
    %v269 = vunpack.c.l.b16 %v198
    %v270 = vunpack.c.l.b16 %v199
    %v271 = vunpack.c.l.b16 %v200
    %v272 = vunpack.c.l.b16 %v201
    %v273 = vunpack.c.l.b16 %v202
    %v274 = vunpack.c.l.b16 %v203
    %v275 = vunpack.c.l.b16 %v204
    %v276 = vunpack.c.l.b16 %v205
    %v277 = vunpack.c.l.b16 %v206
    %v278 = vunpack.c.l.b16 %v207
    %v279 = vunpack.c.l.b16 %v208
    %v280 = vunpack.c.l.b16 %v209
    %v281 = vunpack.c.l.b16 %v210
    %v282 = vpack.c.b16 %v251, %v250
    %v283 = vpack.c.b16 %v253, %v252
    %v284 = vpack.c.b16 %v255, %v254
    %v285 = vpack.c.b16 %v257, %v256
    %v286 = vpack.c.b16 %v259, %v258
    %v287 = vpack.c.b16 %v261, %v260
    %v288 = vpack.c.b16 %v263, %v262
    %v289 = vpack.c.b16 %v265, %v264
    %v290 = vpack.c.b16 %v267, %v266
    %v291 = vpack.c.b16 %v269, %v268
    %v292 = vpack.c.b16 %v271, %v270
    %v293 = vpack.c.b16 %v273, %v272
    %v294 = vpack.c.b16 %v275, %v274
    %v295 = vpack.c.b16 %v277, %v276
    %v296 = vpack.c.b16 %v279, %v278
    %v297 = vpack.c.b16 %v281, %v280
    %314 = vmatprep.subr.bf16.mxu0 0
    %315 = vmatpush1.bf16.msra.mxu0 %v282
    %316 = vmatprep.subr.bf16.mxu0 0
    %317 = vmatpush1.bf16.msra.mxu0 %v283
    %318 = vmatprep.subr.bf16.mxu0 0
    %319 = vmatpush1.bf16.msra.mxu0 %v284
    %320 = vmatprep.subr.bf16.mxu0 0
    %321 = vmatpush1.bf16.msra.mxu0 %v285
    %322 = vmatprep.subr.bf16.mxu0 0
    %323 = vmatpush1.bf16.msra.mxu0 %v286
    %324 = vmatprep.subr.bf16.mxu0 0
    %325 = vmatpush1.bf16.msra.mxu0 %v287
    %326 = vmatprep.subr.bf16.mxu0 0
    %327 = vmatpush1.bf16.msra.mxu0 %v288
    %328 = vmatprep.subr.bf16.mxu0 0
    %329 = vmatpush1.bf16.msra.mxu0 %v289
    %330 = vmatprep.subr.bf16.mxu0 0
    %331 = vmatpush1.bf16.msra.mxu0 %v290
    %332 = vmatprep.subr.bf16.mxu0 0
    %333 = vmatpush1.bf16.msra.mxu0 %v291
    %334 = vmatprep.subr.bf16.mxu0 0
    %335 = vmatpush1.bf16.msra.mxu0 %v292
    %336 = vmatprep.subr.bf16.mxu0 0
    %337 = vmatpush1.bf16.msra.mxu0 %v293
    %338 = vmatprep.subr.bf16.mxu0 0
    %339 = vmatpush1.bf16.msra.mxu0 %v294
    %340 = vmatprep.subr.bf16.mxu0 0
    %341 = vmatpush1.bf16.msra.mxu0 %v295
    %342 = vmatprep.subr.bf16.mxu0 0
    %343 = vmatpush1.bf16.msra.mxu0 %v296
    %344 = vmatprep.subr.bf16.mxu0 0
    %345 = vmatpush1.bf16.msra.mxu0 %v297
    %346 = vmatprep.mubr.bf16.mxu0 %v178
    %347 = vmatmul.mubr.bf16.gmra.mrb[0].mxu0 %v177
    %v348 = vpop.f32.mrb[0].mxu0
    %v349 = vadd.f32 %v216, %v348
    %v350 = vpop.f32.mrb[0].mxu0
    %v351 = vpop.f32.mrb[0].mxu0
    %v352 = vadd.f32 %v216, %v351
    %v353 = vpop.f32.mrb[0].mxu0
    %354 = vdwg.mxu0
    %v355 = vmax.f32 %v349, 0.0
    %v356 = vmax.f32 %v352, 0.0
    %v357 = vpack.c.bf16 %v356, %v355
    %v358 = vld [vmem:[#allocation8] sm:$0xf]
    %v359 = vld [vmem:[#allocation8 + $0x4] sm:$0xf]
    %v360 = vld [vmem:[#allocation8 + $0x8] sm:$0xf]
    %v361 = vld [vmem:[#allocation8 + $0xc] sm:$0xf]
    %v362 = vld [vmem:[#allocation8 + $0x10] sm:$0xf]
    %v363 = vld [vmem:[#allocation8 + $0x14] sm:$0xf]
    %v364 = vld [vmem:[#allocation8 + $0x18] sm:$0xf]
    %v365 = vld [vmem:[#allocation8 + $0x1c] sm:$0xf]
    %v366 = vld [vmem:[#allocation8 + $0x20] sm:$0xf]
    %v367 = vld [vmem:[#allocation8 + $0x24] sm:$0xf]
    %v368 = vld [vmem:[#allocation8 + $0x28] sm:$0xf]
    %v369 = vld [vmem:[#allocation8 + $0x2c] sm:$0xf]
    %v370 = vld [vmem:[#allocation8 + $0x30] sm:$0xf]
    %v371 = vld [vmem:[#allocation8 + $0x34] sm:$0xf]
    %v372 = vld [vmem:[#allocation8 + $0x38] sm:$0xf]
    %v373 = vld [vmem:[#allocation8 + $0x3c] sm:$0xf]
    %v374 = vld [vmem:[%s6] sm:$0x1]
    %v376 = vlaneseq
    %v377 = vshrl.u32 %v376, 7
    %v378 = vsub.s32 0, %v377
    %v379 = vrot.slane %v374, %v378
    %v397 = vunpack.c.l.b16 %v358
    %v398 = vunpack.c.l.b16 %v359
    %v399 = vunpack.c.l.b16 %v360
    %v400 = vunpack.c.l.b16 %v361
    %v401 = vunpack.c.l.b16 %v362
    %v402 = vunpack.c.l.b16 %v363
    %v403 = vunpack.c.l.b16 %v364
    %v404 = vunpack.c.l.b16 %v365
    %v405 = vunpack.c.l.b16 %v366
    %v406 = vunpack.c.l.b16 %v367
    %v407 = vunpack.c.l.b16 %v368
    %v408 = vunpack.c.l.b16 %v369
    %v409 = vunpack.c.l.b16 %v370
    %v410 = vunpack.c.l.b16 %v371
    %v411 = vunpack.c.l.b16 %v372
    %v412 = vunpack.c.l.b16 %v373
    %v413 = vpack.c.b16 %v398, %v397
    %v414 = vpack.c.b16 %v400, %v399
    %v415 = vpack.c.b16 %v402, %v401
    %v416 = vpack.c.b16 %v404, %v403
    %v417 = vpack.c.b16 %v406, %v405
    %v418 = vpack.c.b16 %v408, %v407
    %v419 = vpack.c.b16 %v410, %v409
    %v420 = vpack.c.b16 %v412, %v411
    %429 = vmatprep.subr.bf16.mxu0 0
    %430 = vmatpush1.bf16.msra.mxu0 %v413
    %431 = vmatprep.subr.bf16.mxu0 0
    %432 = vmatpush1.bf16.msra.mxu0 %v414
    %433 = vmatprep.subr.bf16.mxu0 0
    %434 = vmatpush1.bf16.msra.mxu0 %v415
    %435 = vmatprep.subr.bf16.mxu0 0
    %436 = vmatpush1.bf16.msra.mxu0 %v416
    %437 = vmatprep.subr.bf16.mxu0 0
    %438 = vmatpush1.bf16.msra.mxu0 %v417
    %439 = vmatprep.subr.bf16.mxu0 0
    %440 = vmatpush1.bf16.msra.mxu0 %v418
    %441 = vmatprep.subr.bf16.mxu0 0
    %442 = vmatpush1.bf16.msra.mxu0 %v419
    %443 = vmatprep.subr.bf16.mxu0 0
    %444 = vmatpush1.bf16.msra.mxu0 %v420
    %445 = vmatprep.subr.bf16.mxu0 0
    %446 = vmatpush1.bf16.msra.mxu0 0
    %447 = vmatprep.subr.bf16.mxu0 0
    %448 = vmatpush1.bf16.msra.mxu0 0
    %449 = vmatprep.subr.bf16.mxu0 0
    %450 = vmatpush1.bf16.msra.mxu0 0
    %451 = vmatprep.subr.bf16.mxu0 0
    %452 = vmatpush1.bf16.msra.mxu0 0
    %453 = vmatprep.subr.bf16.mxu0 0
    %454 = vmatpush1.bf16.msra.mxu0 0
    %455 = vmatprep.subr.bf16.mxu0 0
    %456 = vmatpush1.bf16.msra.mxu0 0
    %457 = vmatprep.subr.bf16.mxu0 0
    %458 = vmatpush1.bf16.msra.mxu0 0
    %459 = vmatprep.subr.bf16.mxu0 0
    %460 = vmatpush1.bf16.msra.mxu0 0
    %461 = vmatprep.mubr.bf16.mxu0 0
    %462 = vmatmul.mubr.bf16.gmra.mrb[0].mxu0 %v357
    %v463 = vpop.f32.mrb[0].mxu0
    %v464 = vadd.f32 %v379, %v463
    %v465 = vpop.f32.mrb[0].mxu0
    %v466 = vpop.f32.mrb[0].mxu0
    %v467 = vadd.f32 %v379, %v466
    %v468 = vpop.f32.mrb[0].mxu0
    %469 = vdwg.mxu0
    %v470 = vpack.c.bf16 %v467, %v464
    %v472 = vunpack.c.l.b16 %v470
    %v473 = vunpack.c.h.b16 %v470
    %v474 = vpack.c.b16 %v472, %v472
    %v475 = vpack.c.b16 %v473, %v473
    %478 = vst [vmem:[#allocation10] sm:$0xf] %v474
    %479 = vst [vmem:[#allocation10 + $0x4] sm:$0xf] %v475
    // Predicated region
    $region46: #{tpu_custom_call.1} parent=1 // pred_check
      _
    $region47: #{tpu_custom_call.1} parent=1 // pred_check_branch
      %481 = sbr.rel (0) target = $region49
    $region48: #{tpu_custom_call.1} parent=1 // pred_region
      %s483 = ssub.s32 128, 128
      %484 = vsyncadd [#allocation4], %s483
      %s485 = sshll.u32 [#allocation10], 4
      %s486 = int_to_ptr.vmem [resolvable:$true] %s485
      %491 = dma.vmem_to_hbm [thread:$0]  %s486, 128, %s7, [#allocation4], 64, 64, 4
    $region49: #{tpu_custom_call.1} parent=1 // pred_fallthru
      _
    // Predicated region
    $region50: #{tpu_custom_call.1} parent=1 // pred_check
      _
    $region51: #{tpu_custom_call.1} parent=1 // pred_check_branch
      %493 = sbr.rel (0) target = $region53
    $region52: #{tpu_custom_call.1} parent=1 // pred_region
      %494 = dma.done [#allocation4], 128
    $region53: #{tpu_custom_call.1} parent=1 // pred_fallthru
      _
    %495 = vsyncpa [#allocation3], 1
    %496 = vsyncpa [#allocation6], 1
    %497 = vsyncpa [#allocation9], 1
    %498 = vsyncpa [#allocation4], 1

</llo_original>
